<compile_context>
chip_gen: v7x
topology: tpu7x:2x2x1
jax: 0.10.0
libtpu: 0.0.40
codegen_flags: <defaults>
</compile_context>

<pallas_src>
import functools

import jax
import jax.numpy as jnp
import numpy as np
from jax.experimental import pallas as pl
from jax.experimental.pallas import tpu as pltpu

EPS = 1e-5  # nn.InstanceNorm2d default


# ----------------------------- kernel helpers ------------------------------


def _roll_lanes(x, shift):
    """Circular roll along the flat spatial (lane) axis, jnp.roll semantics."""
    n = x.shape[-1]
    shift = shift % n                       # static python int, non-negative
    if shift == 0:
        return x
    return pltpu.roll(x, shift, axis=1)


def _stack_pano_views(x, views_ref, masks, W):
    """Stage the 9 pano-padded stencil views of a flat (Cin, H*W) image into
    the (9*Cin, H*W) scratch `views_ref`, row k*Cin + c (k = kh*3 + kw) holding
        x[c, clamp(h+kh-1, 0, H-1), (w+kw-1) % W]
    i.e. circular padding along W, replicate padding along H ('pano' pad).
    Staging in-place keeps only ~2 full views live at any time.
    """
    cin = x.shape[0]
    wrap_l, wrap_r, top, bot = masks        # (1, H*W) boolean masks (hoisted)

    # Width shifts (circular): one lane roll + a second roll selected on the
    # wrap column.  All rolls are XLU lane rotations (no relayout copies).
    w_m1 = jnp.where(wrap_l, _roll_lanes(x, -(W - 1)), _roll_lanes(x, 1))
    w_p1 = jnp.where(wrap_r, _roll_lanes(x, W - 1), _roll_lanes(x, -1))
    w_views = (w_m1, x, w_p1)               # dw = -1, 0, +1

    # Height shifts (replicate): +/-W lane rolls + select on the edge rows.
    for dh in (-1, 0, 1):                   # kh = dh + 1
        for dw in (-1, 0, 1):               # kw = dw + 1
            v = w_views[dw + 1]
            if dh == -1:
                v = jnp.where(top, v, _roll_lanes(v, W))
            elif dh == 1:
                v = jnp.where(bot, v, _roll_lanes(v, -W))
            k = (dh + 1) * 3 + (dw + 1)
            views_ref[k * cin:(k + 1) * cin, :] = v


def _conv1_block(x, w_ref, views_ref, masks, W):
    """pano-pad -> SN conv3x3 -> InstanceNorm -> ReLU on a flat (Cin, H*W) image."""
    hw = x.shape[-1]
    _stack_pano_views(x, views_ref, masks, W)

    # Single stacked MXU matmul: (Cout, 9*Cin) @ (9*Cin, H*W), bf16 operands,
    # f32 accumulation (K = 9*Cin instead of 9 separate K=Cin matmuls).
    stacked = views_ref[...].astype(jnp.bfloat16)
    acc = jnp.dot(w_ref[...], stacked, preferred_element_type=jnp.float32)

    # InstanceNorm2d (affine=False): two-pass per-channel statistics over lanes.
    inv_n = 1.0 / hw
    mean = jnp.sum(acc, axis=1, keepdims=True) * inv_n
    xc = acc - mean
    var = jnp.sum(xc * xc, axis=1, keepdims=True) * inv_n
    y = xc * jax.lax.rsqrt(var + EPS)
    return jnp.maximum(y, 0.0)              # ReLU


def _conv2_kernel(x_ref, w1_ref, w2_ref, o_ref, v1_ref, v2_ref, *, H, W):
    # x_ref  : (nb, Cin, H*W)    nb batch images, channels x flat spatial
    # w1_ref : (C1, 9*Cin) bf16  matmul-ready SN conv weight, col = k*Cin + c
    # w2_ref : (C2, 9*C1)  bf16
    # o_ref  : (nb, C2, H*W)     lane-dense output (H*W multiple of 128)
    # v1_ref : (9*Cin, H*W) f32  scratch for the stacked stencil views, block 1
    # v2_ref : (9*C1,  H*W) f32  scratch for the stacked stencil views, block 2
    hw = H * W

    # Boundary masks: built once per grid step and shared by both conv blocks
    # and all nb images (JAX does not CSE broadcasts / iotas -> hoist them).
    p = jax.lax.broadcasted_iota(jnp.int32, (1, hw), 1)     # flat index h*W+w
    if (W & (W - 1)) == 0:                                   # pow-2 W: AND
        col = jnp.bitwise_and(p, W - 1)
    else:
        col = p % W
    masks = (col == 0, col == W - 1, p < W, p >= (H - 1) * W)

    for b in range(x_ref.shape[0]):         # static unroll over the batch block
        x = x_ref[b].astype(jnp.float32)
        h1 = _conv1_block(x, w1_ref, v1_ref, masks, W)    # block 1 (in VMEM)
        h2 = _conv1_block(h1, w2_ref, v2_ref, masks, W)   # block 2 (fused)
        o_ref[b] = h2.astype(o_ref.dtype)


# ------------------------------ host wrapper -------------------------------


def _spectral_normalize(w_oihw, iters=30):
    """SNConv2d weight: divide by the largest singular value of W.reshape(Cout,-1).
    Power iteration run to convergence; stand-in for torch.nn.utils.spectral_norm."""
    mat = w_oihw.reshape(w_oihw.shape[0], -1)
    v = jnp.ones((mat.shape[1],), jnp.float32)
    for _ in range(iters):
        u = mat @ v
        u = u / (jnp.linalg.norm(u) + 1e-12)
        v = mat.T @ u
        v = v / (jnp.linalg.norm(v) + 1e-12)
    sigma = u @ (mat @ v)
    return w_oihw / sigma


def _prep_weight(w_oihw):
    """(Cout, Cin, 3, 3) -> matmul-ready bf16 (Cout, 9*Cin), col = (kh*3+kw)*Cin + c."""
    cout, cin = w_oihw.shape[0], w_oihw.shape[1]
    w = jnp.transpose(w_oihw, (0, 2, 3, 1)).reshape(cout, 9 * cin)
    return w.astype(jnp.bfloat16)


def _pick_batch_block(n):
    """Images per grid step: fold the batch into few fat steps, but keep >= 2
    grid steps whenever N >= 2 so both v7x TensorCores stay busy."""
    if n <= 2:
        return 1
    for nb in range(n // 2, 0, -1):
        if n % nb == 0:
            return nb
    return 1


def conv2_forward(x_nchw, w1_oihw, w2_oihw, out_dtype=jnp.float32):
    """conv2.forward: two fused conv1 blocks. Input/output are NCHW like PyTorch."""
    w1 = _prep_weight(_spectral_normalize(w1_oihw))
    w2 = _prep_weight(_spectral_normalize(w2_oihw))
    n, cin, H, W = x_nchw.shape
    c1, c2 = w1.shape[0], w2.shape[0]
    hw = H * W
    nb = _pick_batch_block(n)

    x_flat = x_nchw.reshape(n, cin, hw)            # metadata-only reshape

    # TODO(synk): for large H*W (v7x: 64 MiB VMEM) add an H-tiled grid axis with
    # a 2-row halo and stream the InstanceNorm sum/sum-of-squares across an
    # 'arbitrary' H axis, normalizing in a second light pass.
    # TODO(synk): for N == 1 on v7x, add a second parallel axis (split Cout or
    # H halves) so the second TensorCore gets work.
    out = pl.pallas_call(
        functools.partial(_conv2_kernel, H=H, W=W),
        out_shape=jax.ShapeDtypeStruct((n, c2, hw), out_dtype),
        grid=(n // nb,),
        in_specs=[
            pl.BlockSpec((nb, cin, hw), lambda i: (i, 0, 0)),
            pl.BlockSpec((c1, 9 * cin), lambda i: (0, 0)),
            pl.BlockSpec((c2, 9 * c1), lambda i: (0, 0)),
        ],
        out_specs=pl.BlockSpec((nb, c2, hw), lambda i: (i, 0, 0)),
        scratch_shapes=[
            pltpu.VMEM((9 * cin, hw), jnp.float32),
            pltpu.VMEM((9 * c1, hw), jnp.float32),
        ],
        compiler_params=pltpu.CompilerParams(
            dimension_semantics=("parallel",),
            vmem_limit_bytes=32 * 1024 * 1024),
    )(x_flat, w1, w2)
    return out.reshape(n, c2, H, W)


# --------------------------- reference & testing ---------------------------


def _reference_conv2(x_nchw, w1_oihw, w2_oihw):
    """Pure-JAX f32 reference with identical semantics (pad -> conv -> IN -> ReLU) x2."""
    def block(x, w):
        xp = jnp.pad(x, ((0, 0), (0, 0), (0, 0), (1, 1)), mode="wrap")
        xp = jnp.pad(xp, ((0, 0), (0, 0), (1, 1), (0, 0)), mode="edge")
        y = jax.lax.conv_general_dilated(
            xp, w, window_strides=(1, 1), padding="VALID",
            dimension_numbers=("NCHW", "OIHW", "NCHW"))
        mean = jnp.mean(y, axis=(2, 3), keepdims=True)
        var = jnp.mean((y - mean) ** 2, axis=(2, 3), keepdims=True)
        y = (y - mean) * jax.lax.rsqrt(var + EPS)
        return jnp.maximum(y, 0.0)

    x = block(x_nchw, _spectral_normalize(w1_oihw))
    return block(x, _spectral_normalize(w2_oihw))


def _init_conv_weight(key, out_ch, in_ch, k=3):
    # kaiming_uniform(a=sqrt(5)) as in nn.Conv2d default init
    fan_in = in_ch * k * k
    bound = 1.0 / jnp.sqrt(fan_in)
    return jax.random.uniform(key, (out_ch, in_ch, k, k), jnp.float32,
                              -bound, bound)


if __name__ == "__main__":
    key = jax.random.PRNGKey(0)
    k_x, k_w1, k_w2 = jax.random.split(key, 3)

    N, C_in, C_out, H, W = 2, 4, 8, 16, 16
    x = jax.random.normal(k_x, (N, C_in, H, W), jnp.float32)
    w1 = _init_conv_weight(k_w1, C_out, C_in)    # (8, 4, 3, 3)
    w2 = _init_conv_weight(k_w2, C_out, C_out)   # (8, 8, 3, 3)

    y = jax.jit(conv2_forward)(x, w1, w2)
    jax.block_until_ready(y)
    assert y.shape == (N, C_out, H, W), y.shape

    # Reference is pure f32; the kernel feeds the MXU bf16 (f32 accumulation),
    # so tolerance reflects bf16 operand rounding across the two chained blocks.
    y_ref = jax.jit(_reference_conv2)(x, w1, w2)
    np.testing.assert_allclose(np.asarray(y), np.asarray(y_ref),
                               rtol=5e-2, atol=5e-2)
    print("KERNEL_OK")
</pallas_src>

<mosaic_0001>
module attributes {stable_mosaic.version = 11 : i64} {
  func.func @_conv2_kernel(%arg0: i32, %arg1: memref<1x4x256xf32, #tpu.memory_space<vmem>>, %arg2: memref<8x36xbf16, #tpu.memory_space<vmem>>, %arg3: memref<8x72xbf16, #tpu.memory_space<vmem>>, %arg4: memref<1x8x256xf32, #tpu.memory_space<vmem>>, %arg5: memref<36x256xf32, #tpu.memory_space<vmem>>, %arg6: memref<72x256xf32, #tpu.memory_space<vmem>>) attributes {dimension_semantics = [#tpu.dimension_semantics<parallel>], iteration_bounds = array<i64: 2>, scalar_prefetch = 0 : i64, scratch_operands = 2 : i64, tpu.core_type = #tpu.core_type<tc>, window_params = [{transform_indices = @transform_0, window_bounds = array<i64: 1, 4, 256>}, {pipeline_mode = #tpu.pipeline_mode<synchronous>, transform_indices = @transform_1, window_bounds = array<i64: 8, 36>}, {pipeline_mode = #tpu.pipeline_mode<synchronous>, transform_indices = @transform_2, window_bounds = array<i64: 8, 72>}, {transform_indices = @transform_3, window_bounds = array<i64: 1, 8, 256>}]} {
    %0 = tpu.iota {dimensions = array<i32: 1>} : vector<1x256xi32>
    %c15_i32 = arith.constant 15 : i32
    %1 = vector.broadcast %c15_i32 : i32 to vector<1x256xi32>
    %2 = arith.andi %0, %1 : vector<1x256xi32>
    %c0_i32 = arith.constant 0 : i32
    %3 = vector.broadcast %c0_i32 : i32 to vector<1x256xi32>
    %4 = arith.cmpi eq, %2, %3 : vector<1x256xi32>
    %c15_i32_0 = arith.constant 15 : i32
    %5 = vector.broadcast %c15_i32_0 : i32 to vector<1x256xi32>
    %6 = arith.cmpi eq, %2, %5 : vector<1x256xi32>
    %c16_i32 = arith.constant 16 : i32
    %7 = vector.broadcast %c16_i32 : i32 to vector<1x256xi32>
    %8 = arith.cmpi slt, %0, %7 : vector<1x256xi32>
    %c240_i32 = arith.constant 240 : i32
    %9 = vector.broadcast %c240_i32 : i32 to vector<1x256xi32>
    %10 = arith.cmpi sge, %0, %9 : vector<1x256xi32>
    %c0 = arith.constant 0 : index
    %c0_1 = arith.constant 0 : index
    %c0_2 = arith.constant 0 : index
    %11 = vector.load %arg1[%c0, %c0_1, %c0_2] : memref<1x4x256xf32, #tpu.memory_space<vmem>>, vector<1x4x256xf32>
    %12 = vector.shape_cast %11 : vector<1x4x256xf32> to vector<4x256xf32>
    %c241_i32 = arith.constant 241 : i32
    %13 = tpu.dynamic_rotate %12 by %c241_i32 dim 1 : vector<4x256xf32>, i32 -> vector<4x256xf32>
    %c1_i32 = arith.constant 1 : i32
    %14 = tpu.dynamic_rotate %12 by %c1_i32 dim 1 : vector<4x256xf32>, i32 -> vector<4x256xf32>
    %15 = vector.shape_cast %4 : vector<1x256xi1> to vector<1x256xi1>
    %16 = vector.broadcast %15 : vector<1x256xi1> to vector<4x256xi1>
    %17 = arith.select %16, %13, %14 : vector<4x256xi1>, vector<4x256xf32>
    %c15_i32_3 = arith.constant 15 : i32
    %18 = tpu.dynamic_rotate %12 by %c15_i32_3 dim 1 : vector<4x256xf32>, i32 -> vector<4x256xf32>
    %c255_i32 = arith.constant 255 : i32
    %19 = tpu.dynamic_rotate %12 by %c255_i32 dim 1 : vector<4x256xf32>, i32 -> vector<4x256xf32>
    %20 = vector.shape_cast %6 : vector<1x256xi1> to vector<1x256xi1>
    %21 = vector.broadcast %20 : vector<1x256xi1> to vector<4x256xi1>
    %22 = arith.select %21, %18, %19 : vector<4x256xi1>, vector<4x256xf32>
    %c16_i32_4 = arith.constant 16 : i32
    %23 = tpu.dynamic_rotate %17 by %c16_i32_4 dim 1 : vector<4x256xf32>, i32 -> vector<4x256xf32>
    %24 = vector.shape_cast %8 : vector<1x256xi1> to vector<1x256xi1>
    %25 = vector.broadcast %24 : vector<1x256xi1> to vector<4x256xi1>
    %26 = arith.select %25, %17, %23 : vector<4x256xi1>, vector<4x256xf32>
    %c0_5 = arith.constant 0 : index
    %c0_6 = arith.constant 0 : index
    %27 = vector.load %arg5[%c0_5, %c0_6] : memref<36x256xf32, #tpu.memory_space<vmem>>, vector<4x256xf32>
    tpu.vector_store %arg5[%c0_5, %c0_6], %26 {strides = array<i32>} : memref<36x256xf32, #tpu.memory_space<vmem>>, vector<4x256xf32>,
    %c16_i32_7 = arith.constant 16 : i32
    %28 = tpu.dynamic_rotate %12 by %c16_i32_7 dim 1 : vector<4x256xf32>, i32 -> vector<4x256xf32>
    %29 = vector.shape_cast %8 : vector<1x256xi1> to vector<1x256xi1>
    %30 = vector.broadcast %29 : vector<1x256xi1> to vector<4x256xi1>
    %31 = arith.select %30, %12, %28 : vector<4x256xi1>, vector<4x256xf32>
    %c4 = arith.constant 4 : index
    %c0_8 = arith.constant 0 : index
    %32 = vector.load %arg5[%c4, %c0_8] : memref<36x256xf32, #tpu.memory_space<vmem>>, vector<4x256xf32>
    tpu.vector_store %arg5[%c4, %c0_8], %31 {strides = array<i32>} : memref<36x256xf32, #tpu.memory_space<vmem>>, vector<4x256xf32>,
    %c16_i32_9 = arith.constant 16 : i32
    %33 = tpu.dynamic_rotate %22 by %c16_i32_9 dim 1 : vector<4x256xf32>, i32 -> vector<4x256xf32>
    %34 = vector.shape_cast %8 : vector<1x256xi1> to vector<1x256xi1>
    %35 = vector.broadcast %34 : vector<1x256xi1> to vector<4x256xi1>
    %36 = arith.select %35, %22, %33 : vector<4x256xi1>, vector<4x256xf32>
    %c8 = arith.constant 8 : index
    %c0_10 = arith.constant 0 : index
    %37 = vector.load %arg5[%c8, %c0_10] : memref<36x256xf32, #tpu.memory_space<vmem>>, vector<4x256xf32>
    tpu.vector_store %arg5[%c8, %c0_10], %36 {strides = array<i32>} : memref<36x256xf32, #tpu.memory_space<vmem>>, vector<4x256xf32>,
    %c12 = arith.constant 12 : index
    %c0_11 = arith.constant 0 : index
    %38 = vector.load %arg5[%c12, %c0_11] : memref<36x256xf32, #tpu.memory_space<vmem>>, vector<4x256xf32>
    tpu.vector_store %arg5[%c12, %c0_11], %17 {strides = array<i32>} : memref<36x256xf32, #tpu.memory_space<vmem>>, vector<4x256xf32>,
    %c16 = arith.constant 16 : index
    %c0_12 = arith.constant 0 : index
    %39 = vector.load %arg5[%c16, %c0_12] : memref<36x256xf32, #tpu.memory_space<vmem>>, vector<4x256xf32>
    tpu.vector_store %arg5[%c16, %c0_12], %12 {strides = array<i32>} : memref<36x256xf32, #tpu.memory_space<vmem>>, vector<4x256xf32>,
    %c20 = arith.constant 20 : index
    %c0_13 = arith.constant 0 : index
    %40 = vector.load %arg5[%c20, %c0_13] : memref<36x256xf32, #tpu.memory_space<vmem>>, vector<4x256xf32>
    tpu.vector_store %arg5[%c20, %c0_13], %22 {strides = array<i32>} : memref<36x256xf32, #tpu.memory_space<vmem>>, vector<4x256xf32>,
    %c240_i32_14 = arith.constant 240 : i32
    %41 = tpu.dynamic_rotate %17 by %c240_i32_14 dim 1 : vector<4x256xf32>, i32 -> vector<4x256xf32>
    %42 = vector.shape_cast %10 : vector<1x256xi1> to vector<1x256xi1>
    %43 = vector.broadcast %42 : vector<1x256xi1> to vector<4x256xi1>
    %44 = arith.select %43, %17, %41 : vector<4x256xi1>, vector<4x256xf32>
    %c24 = arith.constant 24 : index
    %c0_15 = arith.constant 0 : index
    %45 = vector.load %arg5[%c24, %c0_15] : memref<36x256xf32, #tpu.memory_space<vmem>>, vector<4x256xf32>
    tpu.vector_store %arg5[%c24, %c0_15], %44 {strides = array<i32>} : memref<36x256xf32, #tpu.memory_space<vmem>>, vector<4x256xf32>,
    %c240_i32_16 = arith.constant 240 : i32
    %46 = tpu.dynamic_rotate %12 by %c240_i32_16 dim 1 : vector<4x256xf32>, i32 -> vector<4x256xf32>
    %47 = vector.shape_cast %10 : vector<1x256xi1> to vector<1x256xi1>
    %48 = vector.broadcast %47 : vector<1x256xi1> to vector<4x256xi1>
    %49 = arith.select %48, %12, %46 : vector<4x256xi1>, vector<4x256xf32>
    %c28 = arith.constant 28 : index
    %c0_17 = arith.constant 0 : index
    %50 = vector.load %arg5[%c28, %c0_17] : memref<36x256xf32, #tpu.memory_space<vmem>>, vector<4x256xf32>
    tpu.vector_store %arg5[%c28, %c0_17], %49 {strides = array<i32>} : memref<36x256xf32, #tpu.memory_space<vmem>>, vector<4x256xf32>,
    %c240_i32_18 = arith.constant 240 : i32
    %51 = tpu.dynamic_rotate %22 by %c240_i32_18 dim 1 : vector<4x256xf32>, i32 -> vector<4x256xf32>
    %52 = vector.shape_cast %10 : vector<1x256xi1> to vector<1x256xi1>
    %53 = vector.broadcast %52 : vector<1x256xi1> to vector<4x256xi1>
    %54 = arith.select %53, %22, %51 : vector<4x256xi1>, vector<4x256xf32>
    %c32 = arith.constant 32 : index
    %c0_19 = arith.constant 0 : index
    %55 = vector.load %arg5[%c32, %c0_19] : memref<36x256xf32, #tpu.memory_space<vmem>>, vector<4x256xf32>
    tpu.vector_store %arg5[%c32, %c0_19], %54 {strides = array<i32>} : memref<36x256xf32, #tpu.memory_space<vmem>>, vector<4x256xf32>,
    %c0_20 = arith.constant 0 : index
    %c0_21 = arith.constant 0 : index
    %56 = vector.load %arg5[%c0_20, %c0_21] : memref<36x256xf32, #tpu.memory_space<vmem>>, vector<36x256xf32>
    %57 = arith.truncf %56 : vector<36x256xf32> to vector<36x256xbf16>
    %c0_22 = arith.constant 0 : index
    %c0_23 = arith.constant 0 : index
    %58 = vector.load %arg2[%c0_22, %c0_23] : memref<8x36xbf16, #tpu.memory_space<vmem>>, vector<8x36xbf16>
    %cst = arith.constant dense<0.000000e+00> : vector<8x256xf32>
    %59 = tpu.matmul %58, %57, %cst {dimension_numbers = #tpu.dot_dimension_numbers<[1], [0], [0], [1], [0, 0, 1, 1], [], []>} : vector<8x36xbf16>, vector<36x256xbf16>, vector<8x256xf32> -> vector<8x256xf32>
    %cst_24 = arith.constant dense<0.000000e+00> : vector<8xf32>
    %60 = vector.multi_reduction <add>, %59, %cst_24 [1] : vector<8x256xf32> to vector<8xf32>
    %61 = vector.shape_cast %60 : vector<8xf32> to vector<8x1xf32>
    %cst_25 = arith.constant 3.906250e-03 : f32
    %62 = vector.broadcast %cst_25 : f32 to vector<8x1xf32>
    %63 = arith.mulf %61, %62 : vector<8x1xf32>
    %64 = vector.broadcast %63 : vector<8x1xf32> to vector<8x256xf32>
    %65 = arith.subf %59, %64 : vector<8x256xf32>
    %66 = arith.mulf %65, %65 : vector<8x256xf32>
    %cst_26 = arith.constant dense<0.000000e+00> : vector<8xf32>
    %67 = vector.multi_reduction <add>, %66, %cst_26 [1] : vector<8x256xf32> to vector<8xf32>
    %68 = vector.shape_cast %67 : vector<8xf32> to vector<8x1xf32>
    %cst_27 = arith.constant 3.906250e-03 : f32
    %69 = vector.broadcast %cst_27 : f32 to vector<8x1xf32>
    %70 = arith.mulf %68, %69 : vector<8x1xf32>
    %cst_28 = arith.constant 9.99999974E-6 : f32
    %71 = vector.broadcast %cst_28 : f32 to vector<8x1xf32>
    %72 = arith.addf %70, %71 : vector<8x1xf32>
    %73 = math.rsqrt %72 : vector<8x1xf32>
    %74 = vector.broadcast %73 : vector<8x1xf32> to vector<8x256xf32>
    %75 = arith.mulf %65, %74 : vector<8x256xf32>
    %cst_29 = arith.constant 0.000000e+00 : f32
    %76 = vector.broadcast %cst_29 : f32 to vector<8x256xf32>
    %77 = arith.maximumf %75, %76 : vector<8x256xf32>
    %c241_i32_30 = arith.constant 241 : i32
    %78 = tpu.dynamic_rotate %77 by %c241_i32_30 dim 1 : vector<8x256xf32>, i32 -> vector<8x256xf32>
    %c1_i32_31 = arith.constant 1 : i32
    %79 = tpu.dynamic_rotate %77 by %c1_i32_31 dim 1 : vector<8x256xf32>, i32 -> vector<8x256xf32>
    %80 = vector.shape_cast %4 : vector<1x256xi1> to vector<1x256xi1>
    %81 = vector.broadcast %80 : vector<1x256xi1> to vector<8x256xi1>
    %82 = arith.select %81, %78, %79 : vector<8x256xi1>, vector<8x256xf32>
    %c15_i32_32 = arith.constant 15 : i32
    %83 = tpu.dynamic_rotate %77 by %c15_i32_32 dim 1 : vector<8x256xf32>, i32 -> vector<8x256xf32>
    %c255_i32_33 = arith.constant 255 : i32
    %84 = tpu.dynamic_rotate %77 by %c255_i32_33 dim 1 : vector<8x256xf32>, i32 -> vector<8x256xf32>
    %85 = vector.shape_cast %6 : vector<1x256xi1> to vector<1x256xi1>
    %86 = vector.broadcast %85 : vector<1x256xi1> to vector<8x256xi1>
    %87 = arith.select %86, %83, %84 : vector<8x256xi1>, vector<8x256xf32>
    %c16_i32_34 = arith.constant 16 : i32
    %88 = tpu.dynamic_rotate %82 by %c16_i32_34 dim 1 : vector<8x256xf32>, i32 -> vector<8x256xf32>
    %89 = vector.shape_cast %8 : vector<1x256xi1> to vector<1x256xi1>
    %90 = vector.broadcast %89 : vector<1x256xi1> to vector<8x256xi1>
    %91 = arith.select %90, %82, %88 : vector<8x256xi1>, vector<8x256xf32>
    %c0_35 = arith.constant 0 : index
    %c0_36 = arith.constant 0 : index
    %92 = vector.load %arg6[%c0_35, %c0_36] : memref<72x256xf32, #tpu.memory_space<vmem>>, vector<8x256xf32>
    tpu.vector_store %arg6[%c0_35, %c0_36], %91 {strides = array<i32>} : memref<72x256xf32, #tpu.memory_space<vmem>>, vector<8x256xf32>,
    %c16_i32_37 = arith.constant 16 : i32
    %93 = tpu.dynamic_rotate %77 by %c16_i32_37 dim 1 : vector<8x256xf32>, i32 -> vector<8x256xf32>
    %94 = vector.shape_cast %8 : vector<1x256xi1> to vector<1x256xi1>
    %95 = vector.broadcast %94 : vector<1x256xi1> to vector<8x256xi1>
    %96 = arith.select %95, %77, %93 : vector<8x256xi1>, vector<8x256xf32>
    %c8_38 = arith.constant 8 : index
    %c0_39 = arith.constant 0 : index
    %97 = vector.load %arg6[%c8_38, %c0_39] : memref<72x256xf32, #tpu.memory_space<vmem>>, vector<8x256xf32>
    tpu.vector_store %arg6[%c8_38, %c0_39], %96 {strides = array<i32>} : memref<72x256xf32, #tpu.memory_space<vmem>>, vector<8x256xf32>,
    %c16_i32_40 = arith.constant 16 : i32
    %98 = tpu.dynamic_rotate %87 by %c16_i32_40 dim 1 : vector<8x256xf32>, i32 -> vector<8x256xf32>
    %99 = vector.shape_cast %8 : vector<1x256xi1> to vector<1x256xi1>
    %100 = vector.broadcast %99 : vector<1x256xi1> to vector<8x256xi1>
    %101 = arith.select %100, %87, %98 : vector<8x256xi1>, vector<8x256xf32>
    %c16_41 = arith.constant 16 : index
    %c0_42 = arith.constant 0 : index
    %102 = vector.load %arg6[%c16_41, %c0_42] : memref<72x256xf32, #tpu.memory_space<vmem>>, vector<8x256xf32>
    tpu.vector_store %arg6[%c16_41, %c0_42], %101 {strides = array<i32>} : memref<72x256xf32, #tpu.memory_space<vmem>>, vector<8x256xf32>,
    %c24_43 = arith.constant 24 : index
    %c0_44 = arith.constant 0 : index
    %103 = vector.load %arg6[%c24_43, %c0_44] : memref<72x256xf32, #tpu.memory_space<vmem>>, vector<8x256xf32>
    tpu.vector_store %arg6[%c24_43, %c0_44], %82 {strides = array<i32>} : memref<72x256xf32, #tpu.memory_space<vmem>>, vector<8x256xf32>,
    %c32_45 = arith.constant 32 : index
    %c0_46 = arith.constant 0 : index
    %104 = vector.load %arg6[%c32_45, %c0_46] : memref<72x256xf32, #tpu.memory_space<vmem>>, vector<8x256xf32>
    tpu.vector_store %arg6[%c32_45, %c0_46], %77 {strides = array<i32>} : memref<72x256xf32, #tpu.memory_space<vmem>>, vector<8x256xf32>,
    %c40 = arith.constant 40 : index
    %c0_47 = arith.constant 0 : index
    %105 = vector.load %arg6[%c40, %c0_47] : memref<72x256xf32, #tpu.memory_space<vmem>>, vector<8x256xf32>
    tpu.vector_store %arg6[%c40, %c0_47], %87 {strides = array<i32>} : memref<72x256xf32, #tpu.memory_space<vmem>>, vector<8x256xf32>,
    %c240_i32_48 = arith.constant 240 : i32
    %106 = tpu.dynamic_rotate %82 by %c240_i32_48 dim 1 : vector<8x256xf32>, i32 -> vector<8x256xf32>
    %107 = vector.shape_cast %10 : vector<1x256xi1> to vector<1x256xi1>
    %108 = vector.broadcast %107 : vector<1x256xi1> to vector<8x256xi1>
    %109 = arith.select %108, %82, %106 : vector<8x256xi1>, vector<8x256xf32>
    %c48 = arith.constant 48 : index
    %c0_49 = arith.constant 0 : index
    %110 = vector.load %arg6[%c48, %c0_49] : memref<72x256xf32, #tpu.memory_space<vmem>>, vector<8x256xf32>
    tpu.vector_store %arg6[%c48, %c0_49], %109 {strides = array<i32>} : memref<72x256xf32, #tpu.memory_space<vmem>>, vector<8x256xf32>,
    %c240_i32_50 = arith.constant 240 : i32
    %111 = tpu.dynamic_rotate %77 by %c240_i32_50 dim 1 : vector<8x256xf32>, i32 -> vector<8x256xf32>
    %112 = vector.shape_cast %10 : vector<1x256xi1> to vector<1x256xi1>
    %113 = vector.broadcast %112 : vector<1x256xi1> to vector<8x256xi1>
    %114 = arith.select %113, %77, %111 : vector<8x256xi1>, vector<8x256xf32>
    %c56 = arith.constant 56 : index
    %c0_51 = arith.constant 0 : index
    %115 = vector.load %arg6[%c56, %c0_51] : memref<72x256xf32, #tpu.memory_space<vmem>>, vector<8x256xf32>
    tpu.vector_store %arg6[%c56, %c0_51], %114 {strides = array<i32>} : memref<72x256xf32, #tpu.memory_space<vmem>>, vector<8x256xf32>,
    %c240_i32_52 = arith.constant 240 : i32
    %116 = tpu.dynamic_rotate %87 by %c240_i32_52 dim 1 : vector<8x256xf32>, i32 -> vector<8x256xf32>
    %117 = vector.shape_cast %10 : vector<1x256xi1> to vector<1x256xi1>
    %118 = vector.broadcast %117 : vector<1x256xi1> to vector<8x256xi1>
    %119 = arith.select %118, %87, %116 : vector<8x256xi1>, vector<8x256xf32>
    %c64 = arith.constant 64 : index
    %c0_53 = arith.constant 0 : index
    %120 = vector.load %arg6[%c64, %c0_53] : memref<72x256xf32, #tpu.memory_space<vmem>>, vector<8x256xf32>
    tpu.vector_store %arg6[%c64, %c0_53], %119 {strides = array<i32>} : memref<72x256xf32, #tpu.memory_space<vmem>>, vector<8x256xf32>,
    %c0_54 = arith.constant 0 : index
    %c0_55 = arith.constant 0 : index
    %121 = vector.load %arg6[%c0_54, %c0_55] : memref<72x256xf32, #tpu.memory_space<vmem>>, vector<72x256xf32>
    %122 = arith.truncf %121 : vector<72x256xf32> to vector<72x256xbf16>
    %c0_56 = arith.constant 0 : index
    %c0_57 = arith.constant 0 : index
    %123 = vector.load %arg3[%c0_56, %c0_57] : memref<8x72xbf16, #tpu.memory_space<vmem>>, vector<8x72xbf16>
    %cst_58 = arith.constant dense<0.000000e+00> : vector<8x256xf32>
    %124 = tpu.matmul %123, %122, %cst_58 {dimension_numbers = #tpu.dot_dimension_numbers<[1], [0], [0], [1], [0, 0, 1, 1], [], []>} : vector<8x72xbf16>, vector<72x256xbf16>, vector<8x256xf32> -> vector<8x256xf32>
    %cst_59 = arith.constant dense<0.000000e+00> : vector<8xf32>
    %125 = vector.multi_reduction <add>, %124, %cst_59 [1] : vector<8x256xf32> to vector<8xf32>
    %126 = vector.shape_cast %125 : vector<8xf32> to vector<8x1xf32>
    %cst_60 = arith.constant 3.906250e-03 : f32
    %127 = vector.broadcast %cst_60 : f32 to vector<8x1xf32>
    %128 = arith.mulf %126, %127 : vector<8x1xf32>
    %129 = vector.broadcast %128 : vector<8x1xf32> to vector<8x256xf32>
    %130 = arith.subf %124, %129 : vector<8x256xf32>
    %131 = arith.mulf %130, %130 : vector<8x256xf32>
    %cst_61 = arith.constant dense<0.000000e+00> : vector<8xf32>
    %132 = vector.multi_reduction <add>, %131, %cst_61 [1] : vector<8x256xf32> to vector<8xf32>
    %133 = vector.shape_cast %132 : vector<8xf32> to vector<8x1xf32>
    %cst_62 = arith.constant 3.906250e-03 : f32
    %134 = vector.broadcast %cst_62 : f32 to vector<8x1xf32>
    %135 = arith.mulf %133, %134 : vector<8x1xf32>
    %cst_63 = arith.constant 9.99999974E-6 : f32
    %136 = vector.broadcast %cst_63 : f32 to vector<8x1xf32>
    %137 = arith.addf %135, %136 : vector<8x1xf32>
    %138 = math.rsqrt %137 : vector<8x1xf32>
    %139 = vector.broadcast %138 : vector<8x1xf32> to vector<8x256xf32>
    %140 = arith.mulf %130, %139 : vector<8x256xf32>
    %cst_64 = arith.constant 0.000000e+00 : f32
    %141 = vector.broadcast %cst_64 : f32 to vector<8x256xf32>
    %142 = arith.maximumf %140, %141 : vector<8x256xf32>
    %c0_65 = arith.constant 0 : index
    %c0_66 = arith.constant 0 : index
    %c0_67 = arith.constant 0 : index
    %143 = vector.load %arg4[%c0_65, %c0_66, %c0_67] : memref<1x8x256xf32, #tpu.memory_space<vmem>>, vector<1x8x256xf32>
    %144 = vector.shape_cast %143 : vector<1x8x256xf32> to vector<8x256xf32>
    %145 = vector.shape_cast %142 : vector<8x256xf32> to vector<1x8x256xf32>
    tpu.vector_store %arg4[%c0_65, %c0_66, %c0_67], %145 {strides = array<i32>} : memref<1x8x256xf32, #tpu.memory_space<vmem>>, vector<1x8x256xf32>,
    return
  }
  func.func @transform_0(%arg0: i32) -> (i32, i32, i32) {
    %c0_i32 = arith.constant 0 : i32
    %c0_i32_0 = arith.constant 0 : i32
    %c0_i32_1 = arith.constant 0 : i32
    return %arg0, %c0_i32, %c0_i32_0 : i32, i32, i32
  }
  func.func @transform_1(%arg0: i32) -> (i32, i32) {
    %c0_i32 = arith.constant 0 : i32
    %c0_i32_0 = arith.constant 0 : i32
    %c0_i32_1 = arith.constant 0 : i32
    return %c0_i32, %c0_i32_0 : i32, i32
  }
  func.func @transform_2(%arg0: i32) -> (i32, i32) {
    %c0_i32 = arith.constant 0 : i32
    %c0_i32_0 = arith.constant 0 : i32
    %c0_i32_1 = arith.constant 0 : i32
    return %c0_i32, %c0_i32_0 : i32, i32
  }
  func.func @transform_3(%arg0: i32) -> (i32, i32, i32) {
    %c0_i32 = arith.constant 0 : i32
    %c0_i32_0 = arith.constant 0 : i32
    %c0_i32_1 = arith.constant 0 : i32
    return %arg0, %c0_i32, %c0_i32_0 : i32, i32, i32
  }
}

</mosaic_0001>

<llo_original>
// kernel: conv2_forward.1
$region0: #{conv2_forward.1}
  #allocation0 [shape = 'u32[]', space=smem, size = 0x4, offset = 0x4, fixed_abs, tag = 'smem constant byte address 0x4 - core index']
  #allocation1 [shape = 'u32[144,128]{1,0:T(1,128)}', space=vmem, size = 0x12000, scoped, tag = 'internal scratch']
  #allocation2 [shape = 'f32[36,256]{1,0:T(8,128)}', space=vmem, size = 0xa000, scoped, tag = 'scratch operand']
  #allocation3 [shape = 'f32[72,256]{1,0:T(8,128)}', space=vmem, size = 0x12000, scoped, tag = 'scratch operand']
  %s0 = inlined_call_operand.vmem [shape: f32[2,4,256], index: 0, kind: input, shape index: {}]
  %s1 = inlined_call_operand.vmem [shape: bf16[8,36], index: 1, kind: input, shape index: {}]
  %s2 = inlined_call_operand.vmem [shape: bf16[8,72], index: 2, kind: input, shape index: {}]
  %s3 = inlined_call_operand.vmem [shape: f32[2,8,256], index: 3, kind: output, shape index: {}]
  %s4 = sld [smem:[#allocation0]]
  $region45: #{conv2_forward.1} parent=0
    _
  %s6 = ssub.s32 1, %s4
  %s7 = scalar_select 0, %s6, %s4
  loop: start=0, step=1, limit=4
  $region2: #{conv2_forward.1} parent=0 // loop_pre_header
    _
  $region3: #{conv2_forward.1} parent=0 // loop_header
    %s9 = sphi 0, %s13
    %p10 = scmp.ge.s32.totalorder %s9, 4
    %s19 = sphi 0, %s21
    %s22 = sphi 0, %s19
    %s23 = sphi 0, %s22
    %s39 = sphi 0, %s23
    %s43 = sphi 0, %s43
    %s45 = sphi 0, %s43
    %s46 = sphi 0, %s45
    %s60 = sphi 0, %s46
    %s64 = sphi 0, %s64
    %s66 = sphi 0, %s64
    %s67 = sphi 0, %s66
    %s81 = sphi 0, %s67
    %s87 = sphi 0, %s89
    %s90 = sphi 0, %s87
    %s91 = sphi 0, %s90
    %s107 = sphi 0, %s91
  $region4: #{conv2_forward.1} parent=0 // loop_header_branch
    %12 = sbr.rel (%p10) target = $region8
  $region5: #{conv2_forward.1} parent=0 // loop_body
    %s14 = ssub.s32 %s9, 1
    %s15 = ssub.s32 %s9, 2
    %s16 = sadd.s32 %s9, 1
    %s17 = ssub.s32 %s9, %s16
    %p18 = scmp.eq.s32.totalorder %s17, 0
    %s20 = sadd.s32 %s19, 1
    %s21 = scalar_select %p18, %s19, %s20
    %p24 = pneg %p18
    %p25 = scmp.eq.s32.totalorder %s9, 1
    %p26 = por %p24, %p25
    %p27 = scmp.ne.s32.totalorder %s19, %s22
    %p28 = scmp.eq.s32.totalorder %s9, 0
    %p29 = por %p27, %p28
    %p30 = scmp.ne.s32.totalorder %s19, %s22
    %p31 = scmp.eq.s32.totalorder %s14, 1
    %p32 = por %p30, %p31
    %p33 = scmp.ne.s32.totalorder %s22, %s23
    %p34 = scmp.eq.s32.totalorder %s14, 0
    %p35 = por %p33, %p34
    %p36 = scmp.ne.s32.totalorder %s22, %s23
    %p37 = scmp.eq.s32.totalorder %s15, 1
    %p38 = por %p36, %p37
    %p40 = scmp.ne.s32.totalorder %s23, %s39
    %p41 = scmp.eq.s32.totalorder %s15, 0
    %p42 = por %p40, %p41
    %s44 = sadd.s32 %s43, 1
    %p47 = scmp.eq.s32.totalorder %s9, 1
    %p48 = scmp.ne.s32.totalorder %s43, %s45
    %p49 = scmp.eq.s32.totalorder %s9, 0
    %p50 = por %p48, %p49
    %p51 = scmp.ne.s32.totalorder %s43, %s45
    %p52 = scmp.eq.s32.totalorder %s14, 1
    %p53 = por %p51, %p52
    %p54 = scmp.ne.s32.totalorder %s45, %s46
    %p55 = scmp.eq.s32.totalorder %s14, 0
    %p56 = por %p54, %p55
    %p57 = scmp.ne.s32.totalorder %s45, %s46
    %p58 = scmp.eq.s32.totalorder %s15, 1
    %p59 = por %p57, %p58
    %p61 = scmp.ne.s32.totalorder %s46, %s60
    %p62 = scmp.eq.s32.totalorder %s15, 0
    %p63 = por %p61, %p62
    %s65 = sadd.s32 %s64, 1
    %p68 = scmp.eq.s32.totalorder %s9, 1
    %p69 = scmp.ne.s32.totalorder %s64, %s66
    %p70 = scmp.eq.s32.totalorder %s9, 0
    %p71 = por %p69, %p70
    %p72 = scmp.ne.s32.totalorder %s64, %s66
    %p73 = scmp.eq.s32.totalorder %s14, 1
    %p74 = por %p72, %p73
    %p75 = scmp.ne.s32.totalorder %s66, %s67
    %p76 = scmp.eq.s32.totalorder %s14, 0
    %p77 = por %p75, %p76
    %p78 = scmp.ne.s32.totalorder %s66, %s67
    %p79 = scmp.eq.s32.totalorder %s15, 1
    %p80 = por %p78, %p79
    %p82 = scmp.ne.s32.totalorder %s67, %s81
    %p83 = scmp.eq.s32.totalorder %s15, 0
    %p84 = por %p82, %p83
    %s85 = ssub.s32 %s9, %s16
    %p86 = scmp.eq.s32.totalorder %s85, 0
    %s88 = sadd.s32 %s87, 1
    %s89 = scalar_select %p86, %s87, %s88
    %p92 = pneg %p86
    %p93 = scmp.eq.s32.totalorder %s9, 1
    %p94 = por %p92, %p93
    %p95 = scmp.ne.s32.totalorder %s87, %s90
    %p96 = scmp.eq.s32.totalorder %s9, 0
    %p97 = por %p95, %p96
    %p98 = scmp.ne.s32.totalorder %s87, %s90
    %p99 = scmp.eq.s32.totalorder %s14, 1
    %p100 = por %p98, %p99
    %p101 = scmp.ne.s32.totalorder %s90, %s91
    %p102 = scmp.eq.s32.totalorder %s14, 0
    %p103 = por %p101, %p102
    %p104 = scmp.ne.s32.totalorder %s90, %s91
    %p105 = scmp.eq.s32.totalorder %s15, 1
    %p106 = por %p104, %p105
    %p108 = scmp.ne.s32.totalorder %s91, %s107
    %p109 = scmp.eq.s32.totalorder %s15, 0
    %p110 = por %p108, %p109
    %p111 = scmp.le.s32.totalorder 1, %s9
    %p112 = scmp.lt.s32.totalorder %s9, 3
    %p113 = pnand %p111, %p112
    %p114 = pneg %p113
    // Predicated region
    $region9: #{conv2_forward.1} parent=5 // pred_check
      _
    $region10: #{conv2_forward.1} parent=5 // pred_check_branch
      %116 = sbr.rel (%p113) target = $region12
    $region11: #{conv2_forward.1} parent=5 // pred_region
      %s117 = ssub.s32 %s9, 1
      // Predicated region
      $region13: #{conv2_forward.1} parent=11 // pred_check
        %p118 = pneg %p56
      $region14: #{conv2_forward.1} parent=11 // pred_check_branch
        %120 = sbr.rel (%p118) target = $region16
      $region15: #{conv2_forward.1} parent=11 // pred_region
        _
      $region16: #{conv2_forward.1} parent=11 // pred_fallthru
        _
      // Predicated region
      $region17: #{conv2_forward.1} parent=11 // pred_check
        %p121 = pneg %p77
      $region18: #{conv2_forward.1} parent=11 // pred_check_branch
        %123 = sbr.rel (%p121) target = $region20
      $region19: #{conv2_forward.1} parent=11 // pred_region
        _
      $region20: #{conv2_forward.1} parent=11 // pred_fallthru
        _
    $region12: #{conv2_forward.1} parent=5 // pred_fallthru
      _
    %p124 = scmp.lt.s32.totalorder %s9, 2
    // Predicated region
    $region21: #{conv2_forward.1} parent=5 // pred_check
      %p125 = pneg %p124
    $region22: #{conv2_forward.1} parent=5 // pred_check_branch
      %127 = sbr.rel (%p125) target = $region24
    $region23: #{conv2_forward.1} parent=5 // pred_region
      // Predicated region
      $region25: #{conv2_forward.1} parent=23 // pred_check
        %p128 = pneg %p29
      $region26: #{conv2_forward.1} parent=23 // pred_check_branch
        %130 = sbr.rel (%p128) target = $region28
      $region27: #{conv2_forward.1} parent=23 // pred_region
        %p131 = scmp.lt.s32.totalorder %s9, 1
        %s132 = scalar_select %p131, %s9, 1
        %s133 = smul.addr %s132, 2
        %s134 = smul.addr %s133, 4
        %s135 = scalar_lea.vmem %s0, %s134
      $region28: #{conv2_forward.1} parent=23 // pred_fallthru
        _
    $region24: #{conv2_forward.1} parent=5 // pred_fallthru
      _
    %p136 = scmp.le.s32.totalorder 1, %s9
    %p137 = scmp.lt.s32.totalorder %s9, 3
    %p138 = pnand %p136, %p137
    %p139 = pneg %p138
    // Predicated region
    $region29: #{conv2_forward.1} parent=5 // pred_check
      _
    $region30: #{conv2_forward.1} parent=5 // pred_check_branch
      %141 = sbr.rel (%p138) target = $region32
    $region31: #{conv2_forward.1} parent=5 // pred_region
      %s142 = ssub.s32 %s9, 1
      %p143 = scmp.lt.s32.totalorder %s14, 1
      %s144 = scalar_select %p143, %s14, 1
      %s145 = smul.addr %s144, 2
      %s146 = smul.addr %s145, 4
      %s147 = scalar_lea.vmem %s0, %s146
      %p148 = pneg %p35
      %p149 = pneg %p32
      %p150 = pneg %p56
      %p151 = pneg %p53
      %p152 = pneg %p77
      %p153 = pneg %p74
      %p154 = pneg %p103
      %p155 = pneg %p100
      %p156 = scmp.lt.s32.totalorder %s14, 1
      %s157 = scalar_select %p156, %s14, 1
      %s158 = smul.addr %s157, 2
      %s159 = smul.addr %s158, 8
      %s160 = scalar_lea.vmem %s3, %s159
      %p161 = scmp.lt.s32.totalorder %s14, 1
      %s162 = scalar_select %p161, %s14, 1
      %s163 = smul.addr %s162, 2
      %s164 = smul.addr %s163, 4
      %s165 = scalar_lea.vmem %s0, %s164
      %p166 = scmp.lt.s32.totalorder %s14, 1
      %s167 = scalar_select %p166, %s14, 1
      %s168 = smul.addr %s167, 2
      %s169 = smul.addr %s168, 8
      %s170 = scalar_lea.vmem %s3, %s169
      %v172 = vlaneseq
      %v173 = vand.u32 %v172, 127
      %v174 = vadd.s32 %v173, 128
      %v175 = vand.u32 %v173, 15
      %v176 = vand.u32 %v174, 15
      %vm177 = vcmp.eq.s32.totalorder %v175, 0
      %vm178 = vcmp.eq.s32.totalorder %v176, 0
      %vm179 = vcmp.eq.s32.totalorder %v175, 15
      %vm180 = vcmp.eq.s32.totalorder %v176, 15
      %vm181 = vcmp.lt.s32.totalorder %v173, 16
      %vm182 = vcmp.lt.s32.totalorder %v174, 16
      %vm183 = vcmp.ge.s32.totalorder %v173, 240
      %vm184 = vcmp.ge.s32.totalorder %v174, 240
      %v185 = vld [vmem:[%s165] sm:$0xff]
      %v187 = vcombine.high %v185, %v185
      %189 = vrot.lane.b32.xlu0 %v185, 113
      %v190 = vpop.permute.xlu0 %189
      %191 = vrot.lane.b32.xlu0 %v187, 113
      %v192 = vpop.permute.xlu0 %191
      %vm193 = vcmp.lt.s32.totalorder %v173, 113
      %v194 = vsel %vm193, %v190, %v192
      %v195 = vsel %vm193, %v192, %v190
      %196 = vrot.lane.b32.xlu0 %v185, 1
      %v197 = vpop.permute.xlu0 %196
      %198 = vrot.lane.b32.xlu0 %v187, 1
      %v199 = vpop.permute.xlu0 %198
      %vm200 = vcmp.lt.s32.totalorder %v173, 1
      %v201 = vsel %vm200, %v197, %v199
      %v202 = vsel %vm200, %v199, %v197
      %v203 = vsel %vm177, 1, 0
      %v204 = vsel %vm178, 1, 0
      %vm205 = vcmp.eq.s32.totalorder %v203, 1
      %vm206 = vcmp.eq.s32.totalorder %v204, 1
      %v207 = vsel %vm205, %v194, %v202
      %v208 = vsel %vm206, %v195, %v201
      %209 = vrot.lane.b32.xlu0 %v185, 15
      %v210 = vpop.permute.xlu0 %209
      %211 = vrot.lane.b32.xlu0 %v187, 15
      %v212 = vpop.permute.xlu0 %211
      %vm213 = vcmp.lt.s32.totalorder %v173, 15
      %v214 = vsel %vm213, %v210, %v212
      %v215 = vsel %vm213, %v212, %v210
      %216 = vrot.lane.b32.xlu0 %v185, 127
      %v217 = vpop.permute.xlu0 %216
      %218 = vrot.lane.b32.xlu0 %v187, 127
      %v219 = vpop.permute.xlu0 %218
      %vm220 = vcmp.lt.s32.totalorder %v173, 127
      %v221 = vsel %vm220, %v217, %v219
      %v222 = vsel %vm220, %v219, %v217
      %v223 = vsel %vm179, 1, 0
      %v224 = vsel %vm180, 1, 0
      %vm225 = vcmp.eq.s32.totalorder %v223, 1
      %vm226 = vcmp.eq.s32.totalorder %v224, 1
      %v227 = vsel %vm225, %v215, %v221
      %v228 = vsel %vm226, %v214, %v222
      %229 = vrot.lane.b32.xlu0 %v207, 16
      %v230 = vpop.permute.xlu0 %229
      %231 = vrot.lane.b32.xlu0 %v208, 16
      %v232 = vpop.permute.xlu0 %231
      %v233 = vsel %vm181, %v230, %v232
      %v234 = vsel %vm181, %v232, %v230
      %v235 = vsel %vm181, 1, 0
      %v236 = vsel %vm182, 1, 0
      %vm237 = vcmp.eq.s32.totalorder %v235, 1
      %vm238 = vcmp.eq.s32.totalorder %v236, 1
      %v239 = vsel %vm237, %v207, %v234
      %v240 = vsel %vm238, %v208, %v233
      %241 = vst [vmem:[#allocation2] sm:$0xf] %v239
      %242 = vst [vmem:[#allocation2 + $0x8] sm:$0xf] %v240
      %243 = vrot.lane.b32.xlu0 %v185, 16
      %v244 = vpop.permute.xlu0 %243
      %245 = vrot.lane.b32.xlu0 %v187, 16
      %v246 = vpop.permute.xlu0 %245
      %v247 = vsel %vm181, %v244, %v246
      %v248 = vsel %vm181, %v246, %v244
      %v249 = vsel %vm237, %v185, %v248
      %v250 = vsel %vm238, %v187, %v247
      %v253 = vrot.slane %v249, 4
      %v254 = vrot.slane %v250, 4
      %257 = vst [vmem:[#allocation2] sm:$0xf0] %v253
      %258 = vst [vmem:[#allocation2 + $0x8] sm:$0xf0] %v254
      %259 = vrot.lane.b32.xlu0 %v227, 16
      %v260 = vpop.permute.xlu0 %259
      %261 = vrot.lane.b32.xlu0 %v228, 16
      %v262 = vpop.permute.xlu0 %261
      %v263 = vsel %vm181, %v260, %v262
      %v264 = vsel %vm181, %v262, %v260
      %v265 = vsel %vm237, %v227, %v264
      %v266 = vsel %vm238, %v228, %v263
      %267 = vst [vmem:[#allocation2 + $0x10] sm:$0xf] %v265
      %268 = vst [vmem:[#allocation2 + $0x18] sm:$0xf] %v266
      %v271 = vrot.slane %v207, 4
      %v272 = vrot.slane %v208, 4
      %275 = vst [vmem:[#allocation2 + $0x10] sm:$0xf0] %v271
      %276 = vst [vmem:[#allocation2 + $0x18] sm:$0xf0] %v272
      %277 = vst [vmem:[#allocation2 + $0x20] sm:$0xf] %v185
      %278 = vst [vmem:[#allocation2 + $0x28] sm:$0xf] %v187
      %v281 = vrot.slane %v227, 4
      %v282 = vrot.slane %v228, 4
      %285 = vst [vmem:[#allocation2 + $0x20] sm:$0xf0] %v281
      %286 = vst [vmem:[#allocation2 + $0x28] sm:$0xf0] %v282
      %287 = vrot.lane.b32.xlu0 %v207, 112
      %v288 = vpop.permute.xlu0 %287
      %289 = vrot.lane.b32.xlu0 %v208, 112
      %v290 = vpop.permute.xlu0 %289
      %vm291 = vcmp.lt.s32.totalorder %v173, 112
      %v292 = vsel %vm291, %v288, %v290
      %v293 = vsel %vm291, %v290, %v288
      %v294 = vsel %vm183, 1, 0
      %v295 = vsel %vm184, 1, 0
      %vm296 = vcmp.eq.s32.totalorder %v294, 1
      %vm297 = vcmp.eq.s32.totalorder %v295, 1
      %v298 = vsel %vm296, %v207, %v292
      %v299 = vsel %vm297, %v208, %v293
      %300 = vst [vmem:[#allocation2 + $0x30] sm:$0xf] %v298
      %301 = vst [vmem:[#allocation2 + $0x38] sm:$0xf] %v299
      %302 = vrot.lane.b32.xlu0 %v185, 112
      %v303 = vpop.permute.xlu0 %302
      %304 = vrot.lane.b32.xlu0 %v187, 112
      %v305 = vpop.permute.xlu0 %304
      %v306 = vsel %vm291, %v303, %v305
      %v307 = vsel %vm291, %v305, %v303
      %v308 = vsel %vm296, %v185, %v306
      %v309 = vsel %vm297, %v187, %v307
      %v312 = vrot.slane %v308, 4
      %v313 = vrot.slane %v309, 4
      %316 = vst [vmem:[#allocation2 + $0x30] sm:$0xf0] %v312
      %317 = vst [vmem:[#allocation2 + $0x38] sm:$0xf0] %v313
      %318 = vrot.lane.b32.xlu0 %v227, 112
      %v319 = vpop.permute.xlu0 %318
      %320 = vrot.lane.b32.xlu0 %v228, 112
      %v321 = vpop.permute.xlu0 %320
      %v322 = vsel %vm291, %v319, %v321
      %v323 = vsel %vm291, %v321, %v319
      %v324 = vsel %vm296, %v227, %v322
      %v325 = vsel %vm297, %v228, %v323
      %326 = vst [vmem:[#allocation2 + $0x40] sm:$0xf] %v324
      %327 = vst [vmem:[#allocation2 + $0x48] sm:$0xf] %v325
      %v328 = vld [vmem:[#allocation2] sm:$0xff]
      %v329 = vld [vmem:[#allocation2 + $0x8] sm:$0xff]
      %v330 = vld [vmem:[#allocation2 + $0x10] sm:$0xff]
      %v331 = vld [vmem:[#allocation2 + $0x18] sm:$0xff]
      %v332 = vld [vmem:[#allocation2 + $0x20] sm:$0xff]
      %v333 = vld [vmem:[#allocation2 + $0x28] sm:$0xff]
      %v334 = vld [vmem:[#allocation2 + $0x30] sm:$0xff]
      %v335 = vld [vmem:[#allocation2 + $0x38] sm:$0xff]
      %v336 = vld [vmem:[#allocation2 + $0x40] sm:$0xf]
      %v337 = vld [vmem:[#allocation2 + $0x48] sm:$0xf]
      %v338 = vpack.c.bf16 %v330, %v328
      %v339 = vpack.c.bf16 %v331, %v329
      %v340 = vpack.c.bf16 %v334, %v332
      %v341 = vpack.c.bf16 %v335, %v333
      %v342 = vpack.c.bf16 %v336, %v336
      %v343 = vpack.c.bf16 %v337, %v337
      %v344 = vld [vmem:[%s1] sm:$0xf]
      %vm345 = vcmask 293888
      %v347 = vsel %vm345, %v344, 0
      %vm349 = vcmask 1041408
      %v351 = vsel %vm349, %v342, 0
      %v354 = vsel %vm349, %v343, 0
      %356 = vmatprep.subr.bf16.mxu0 %v339
      %357 = vmatpush1.bf16.msra.mxu0 %v338
      %358 = vmatprep.subr.bf16.mxu0 %v341
      %359 = vmatpush1.bf16.msra.mxu0 %v340
      %360 = vmatprep.subr.bf16.mxu0 %v354
      %361 = vmatpush1.bf16.msra.mxu0 %v351
      %362 = vmatprep.subr.bf16.mxu0 0
      %363 = vmatpush1.bf16.msra.mxu0 0
      %364 = vmatprep.subr.bf16.mxu0 0
      %365 = vmatpush1.bf16.msra.mxu0 0
      %366 = vmatprep.subr.bf16.mxu0 0
      %367 = vmatpush1.bf16.msra.mxu0 0
      %368 = vmatprep.subr.bf16.mxu0 0
      %369 = vmatpush1.bf16.msra.mxu0 0
      %370 = vmatprep.subr.bf16.mxu0 0
      %371 = vmatpush1.bf16.msra.mxu0 0
      %372 = vmatprep.subr.bf16.mxu0 0
      %373 = vmatpush1.bf16.msra.mxu0 0
      %374 = vmatprep.subr.bf16.mxu0 0
      %375 = vmatpush1.bf16.msra.mxu0 0
      %376 = vmatprep.subr.bf16.mxu0 0
      %377 = vmatpush1.bf16.msra.mxu0 0
      %378 = vmatprep.subr.bf16.mxu0 0
      %379 = vmatpush1.bf16.msra.mxu0 0
      %380 = vmatprep.subr.bf16.mxu0 0
      %381 = vmatpush1.bf16.msra.mxu0 0
      %382 = vmatprep.subr.bf16.mxu0 0
      %383 = vmatpush1.bf16.msra.mxu0 0
      %384 = vmatprep.subr.bf16.mxu0 0
      %385 = vmatpush1.bf16.msra.mxu0 0
      %386 = vmatprep.subr.bf16.mxu0 0
      %387 = vmatpush1.bf16.msra.mxu0 0
      %388 = vmatprep.mubr.bf16.mxu0 0
      %389 = vmatmul.mubr.bf16.gmra.mrb[0].mxu0 %v347
      %v390 = vpop.f32.mrb[0].mxu0
      %v391 = vadd.f32 0.0, %v390
      %v392 = vpop.f32.mrb[0].mxu0
      %v393 = vadd.f32 0.0, %v392
      %v394 = vpop.f32.mrb[0].mxu0
      %v395 = vpop.f32.mrb[0].mxu0
      %396 = vdwg.mxu0
      %v397 = vadd.f32 %v391, %v393
      %398 = vadd.xlane.f32.xlu0 %v397
      %v399 = vpop.xlane.xlu0 %398
      %v400 = vmul.f32 %v399, 0.00390625
      %v401 = vsub.f32 %v391, %v400
      %v402 = vsub.f32 %v393, %v400
      %v403 = vmul.f32 %v401, %v401
      %v404 = vmul.f32 %v402, %v402
      %v405 = vadd.f32 %v403, %v404
      %406 = vadd.xlane.f32.xlu0 %v405
      %v407 = vpop.xlane.xlu0 %406
      %v408 = vmul.f32 %v407, 0.00390625
      %v409 = vadd.f32 %v408, 1e-05
      %v410 = vrsqrt.pop %v409
      %v411 = vmul.f32 %v401, %v410
      %v412 = vmul.f32 %v402, %v410
      %v413 = vmax.f32 %v411, 0.0
      %v414 = vmax.f32 %v412, 0.0
      %415 = vrot.lane.b32.xlu0 %v413, 113
      %v416 = vpop.permute.xlu0 %415
      %417 = vrot.lane.b32.xlu0 %v414, 113
      %v418 = vpop.permute.xlu0 %417
      %v419 = vsel %vm193, %v416, %v418
      %v420 = vsel %vm193, %v418, %v416
      %421 = vrot.lane.b32.xlu0 %v413, 1
      %v422 = vpop.permute.xlu0 %421
      %423 = vrot.lane.b32.xlu0 %v414, 1
      %v424 = vpop.permute.xlu0 %423
      %v425 = vsel %vm200, %v422, %v424
      %v426 = vsel %vm200, %v424, %v422
      %v427 = vsel %vm205, %v419, %v426
      %v428 = vsel %vm206, %v420, %v425
      %429 = vrot.lane.b32.xlu0 %v413, 15
      %v430 = vpop.permute.xlu0 %429
      %431 = vrot.lane.b32.xlu0 %v414, 15
      %v432 = vpop.permute.xlu0 %431
      %v433 = vsel %vm213, %v430, %v432
      %v434 = vsel %vm213, %v432, %v430
      %435 = vrot.lane.b32.xlu0 %v413, 127
      %v436 = vpop.permute.xlu0 %435
      %437 = vrot.lane.b32.xlu0 %v414, 127
      %v438 = vpop.permute.xlu0 %437
      %v439 = vsel %vm220, %v436, %v438
      %v440 = vsel %vm220, %v438, %v436
      %v441 = vsel %vm225, %v434, %v439
      %v442 = vsel %vm226, %v433, %v440
      %443 = vrot.lane.b32.xlu0 %v427, 16
      %v444 = vpop.permute.xlu0 %443
      %445 = vrot.lane.b32.xlu0 %v428, 16
      %v446 = vpop.permute.xlu0 %445
      %v447 = vsel %vm181, %v444, %v446
      %v448 = vsel %vm181, %v446, %v444
      %v449 = vsel %vm237, %v427, %v448
      %v450 = vsel %vm238, %v428, %v447
      %451 = vst [vmem:[#allocation3] sm:$0xff] %v449
      %452 = vst [vmem:[#allocation3 + $0x8] sm:$0xff] %v450
      %453 = vrot.lane.b32.xlu0 %v413, 16
      %v454 = vpop.permute.xlu0 %453
      %455 = vrot.lane.b32.xlu0 %v414, 16
      %v456 = vpop.permute.xlu0 %455
      %v457 = vsel %vm181, %v454, %v456
      %v458 = vsel %vm181, %v456, %v454
      %v459 = vsel %vm237, %v413, %v458
      %v460 = vsel %vm238, %v414, %v457
      %461 = vst [vmem:[#allocation3 + $0x10] sm:$0xff] %v459
      %462 = vst [vmem:[#allocation3 + $0x18] sm:$0xff] %v460
      %463 = vrot.lane.b32.xlu0 %v441, 16
      %v464 = vpop.permute.xlu0 %463
      %465 = vrot.lane.b32.xlu0 %v442, 16
      %v466 = vpop.permute.xlu0 %465
      %v467 = vsel %vm181, %v464, %v466
      %v468 = vsel %vm181, %v466, %v464
      %v469 = vsel %vm237, %v441, %v468
      %v470 = vsel %vm238, %v442, %v467
      %471 = vst [vmem:[#allocation3 + $0x20] sm:$0xff] %v469
      %472 = vst [vmem:[#allocation3 + $0x28] sm:$0xff] %v470
      %473 = vst [vmem:[#allocation3 + $0x30] sm:$0xff] %v427
      %474 = vst [vmem:[#allocation3 + $0x38] sm:$0xff] %v428
      %475 = vst [vmem:[#allocation3 + $0x40] sm:$0xff] %v413
      %476 = vst [vmem:[#allocation3 + $0x48] sm:$0xff] %v414
      %477 = vst [vmem:[#allocation3 + $0x50] sm:$0xff] %v441
      %478 = vst [vmem:[#allocation3 + $0x58] sm:$0xff] %v442
      %479 = vrot.lane.b32.xlu0 %v427, 112
      %v480 = vpop.permute.xlu0 %479
      %481 = vrot.lane.b32.xlu0 %v428, 112
      %v482 = vpop.permute.xlu0 %481
      %v483 = vsel %vm291, %v480, %v482
      %v484 = vsel %vm291, %v482, %v480
      %v485 = vsel %vm296, %v427, %v483
      %v486 = vsel %vm297, %v428, %v484
      %487 = vst [vmem:[#allocation3 + $0x60] sm:$0xff] %v485
      %488 = vst [vmem:[#allocation3 + $0x68] sm:$0xff] %v486
      %489 = vrot.lane.b32.xlu0 %v413, 112
      %v490 = vpop.permute.xlu0 %489
      %491 = vrot.lane.b32.xlu0 %v414, 112
      %v492 = vpop.permute.xlu0 %491
      %v493 = vsel %vm291, %v490, %v492
      %v494 = vsel %vm291, %v492, %v490
      %v495 = vsel %vm296, %v413, %v493
      %v496 = vsel %vm297, %v414, %v494
      %497 = vst [vmem:[#allocation3 + $0x70] sm:$0xff] %v495
      %498 = vst [vmem:[#allocation3 + $0x78] sm:$0xff] %v496
      %499 = vrot.lane.b32.xlu0 %v441, 112
      %v500 = vpop.permute.xlu0 %499
      %501 = vrot.lane.b32.xlu0 %v442, 112
      %v502 = vpop.permute.xlu0 %501
      %v503 = vsel %vm291, %v500, %v502
      %v504 = vsel %vm291, %v502, %v500
      %v505 = vsel %vm296, %v441, %v503
      %v506 = vsel %vm297, %v442, %v504
      %507 = vst [vmem:[#allocation3 + $0x80] sm:$0xff] %v505
      %508 = vst [vmem:[#allocation3 + $0x88] sm:$0xff] %v506
      %v509 = vld [vmem:[#allocation3] sm:$0xff]
      %v510 = vld [vmem:[#allocation3 + $0x8] sm:$0xff]
      %v511 = vld [vmem:[#allocation3 + $0x10] sm:$0xff]
      %v512 = vld [vmem:[#allocation3 + $0x18] sm:$0xff]
      %v513 = vld [vmem:[#allocation3 + $0x20] sm:$0xff]
      %v514 = vld [vmem:[#allocation3 + $0x28] sm:$0xff]
      %v515 = vld [vmem:[#allocation3 + $0x30] sm:$0xff]
      %v516 = vld [vmem:[#allocation3 + $0x38] sm:$0xff]
      %v517 = vld [vmem:[#allocation3 + $0x40] sm:$0xff]
      %v518 = vld [vmem:[#allocation3 + $0x48] sm:$0xff]
      %v519 = vld [vmem:[#allocation3 + $0x50] sm:$0xff]
      %v520 = vld [vmem:[#allocation3 + $0x58] sm:$0xff]
      %v521 = vld [vmem:[#allocation3 + $0x60] sm:$0xff]
      %v522 = vld [vmem:[#allocation3 + $0x68] sm:$0xff]
      %v523 = vld [vmem:[#allocation3 + $0x70] sm:$0xff]
      %v524 = vld [vmem:[#allocation3 + $0x78] sm:$0xff]
      %v525 = vld [vmem:[#allocation3 + $0x80] sm:$0xff]
      %v526 = vld [vmem:[#allocation3 + $0x88] sm:$0xff]
      %v527 = vpack.c.bf16 %v511, %v509
      %v528 = vpack.c.bf16 %v512, %v510
      %v529 = vpack.c.bf16 %v515, %v513
      %v530 = vpack.c.bf16 %v516, %v514
      %v531 = vpack.c.bf16 %v519, %v517
      %v532 = vpack.c.bf16 %v520, %v518
      %v533 = vpack.c.bf16 %v523, %v521
      %v534 = vpack.c.bf16 %v524, %v522
      %v535 = vpack.c.bf16 %v525, %v525
      %v536 = vpack.c.bf16 %v526, %v526
      %v537 = vld [vmem:[%s2] sm:$0xf]
      %vm538 = vcmask 588800
      %v540 = vsel %vm538, %v537, 0
      %vm542 = vcmask 1043456
      %v544 = vsel %vm542, %v535, 0
      %v547 = vsel %vm542, %v536, 0
      %549 = vmatprep.subr.bf16.mxu0 %v528
      %550 = vmatpush1.bf16.msra.mxu0 %v527
      %551 = vmatprep.subr.bf16.mxu0 %v530
      %552 = vmatpush1.bf16.msra.mxu0 %v529
      %553 = vmatprep.subr.bf16.mxu0 %v532
      %554 = vmatpush1.bf16.msra.mxu0 %v531
      %555 = vmatprep.subr.bf16.mxu0 %v534
      %556 = vmatpush1.bf16.msra.mxu0 %v533
      %557 = vmatprep.subr.bf16.mxu0 %v547
      %558 = vmatpush1.bf16.msra.mxu0 %v544
      %559 = vmatprep.subr.bf16.mxu0 0
      %560 = vmatpush1.bf16.msra.mxu0 0
      %561 = vmatprep.subr.bf16.mxu0 0
      %562 = vmatpush1.bf16.msra.mxu0 0
      %563 = vmatprep.subr.bf16.mxu0 0
      %564 = vmatpush1.bf16.msra.mxu0 0
      %565 = vmatprep.subr.bf16.mxu0 0
      %566 = vmatpush1.bf16.msra.mxu0 0
      %567 = vmatprep.subr.bf16.mxu0 0
      %568 = vmatpush1.bf16.msra.mxu0 0
      %569 = vmatprep.subr.bf16.mxu0 0
      %570 = vmatpush1.bf16.msra.mxu0 0
      %571 = vmatprep.subr.bf16.mxu0 0
      %572 = vmatpush1.bf16.msra.mxu0 0
      %573 = vmatprep.subr.bf16.mxu0 0
      %574 = vmatpush1.bf16.msra.mxu0 0
      %575 = vmatprep.subr.bf16.mxu0 0
      %576 = vmatpush1.bf16.msra.mxu0 0
      %577 = vmatprep.subr.bf16.mxu0 0
      %578 = vmatpush1.bf16.msra.mxu0 0
      %579 = vmatprep.subr.bf16.mxu0 0
      %580 = vmatpush1.bf16.msra.mxu0 0
      %581 = vmatprep.mubr.bf16.mxu0 0
      %582 = vmatmul.mubr.bf16.gmra.mrb[0].mxu0 %v540
      %v583 = vpop.f32.mrb[0].mxu0
      %v584 = vadd.f32 0.0, %v583
      %v585 = vpop.f32.mrb[0].mxu0
      %v586 = vadd.f32 0.0, %v585
      %v587 = vpop.f32.mrb[0].mxu0
      %v588 = vpop.f32.mrb[0].mxu0
      %589 = vdwg.mxu0
      %v590 = vadd.f32 %v584, %v586
      %591 = vadd.xlane.f32.xlu0 %v590
      %v592 = vpop.xlane.xlu0 %591
      %v593 = vmul.f32 %v592, 0.00390625
      %v594 = vsub.f32 %v584, %v593
      %v595 = vsub.f32 %v586, %v593
      %v596 = vmul.f32 %v594, %v594
      %v597 = vmul.f32 %v595, %v595
      %v598 = vadd.f32 %v596, %v597
      %599 = vadd.xlane.f32.xlu0 %v598
      %v600 = vpop.xlane.xlu0 %599
      %v601 = vmul.f32 %v600, 0.00390625
      %v602 = vadd.f32 %v601, 1e-05
      %v603 = vrsqrt.pop %v602
      %v604 = vmul.f32 %v594, %v603
      %v605 = vmul.f32 %v595, %v603
      %v606 = vmax.f32 %v604, 0.0
      %v607 = vmax.f32 %v605, 0.0
      %608 = vst [vmem:[%s170] sm:$0xff] %v606
      %609 = vst [vmem:[%s170 + $0x8] sm:$0xff] %v607
      %p610 = scmp.lt.s32.totalorder %s14, 1
      %s611 = scalar_select %p610, %s14, 1
      %s612 = smul.addr %s611, 2
      %s613 = smul.addr %s612, 8
      %s614 = scalar_lea.vmem %s3, %s613
      // Predicated region
      $region33: #{conv2_forward.1} parent=31 // pred_check
        %p615 = pneg %p100
      $region34: #{conv2_forward.1} parent=31 // pred_check_branch
        %617 = sbr.rel (%p615) target = $region36
      $region35: #{conv2_forward.1} parent=31 // pred_region
        _
      $region36: #{conv2_forward.1} parent=31 // pred_fallthru
        _
    $region32: #{conv2_forward.1} parent=5 // pred_fallthru
      _
    %p618 = scmp.le.s32.totalorder 2, %s9
    // Predicated region
    $region37: #{conv2_forward.1} parent=5 // pred_check
      %p619 = pneg %p618
    $region38: #{conv2_forward.1} parent=5 // pred_check_branch
      %621 = sbr.rel (%p619) target = $region40
    $region39: #{conv2_forward.1} parent=5 // pred_region
      %s622 = ssub.s32 %s9, 2
      // Predicated region
      $region41: #{conv2_forward.1} parent=39 // pred_check
        %p623 = pneg %p106
      $region42: #{conv2_forward.1} parent=39 // pred_check_branch
        %625 = sbr.rel (%p623) target = $region44
      $region43: #{conv2_forward.1} parent=39 // pred_region
        %p626 = scmp.lt.s32.totalorder %s15, 1
        %s627 = scalar_select %p626, %s15, 1
        %s628 = smul.addr %s627, 2
        %s629 = smul.addr %s628, 8
        %s630 = scalar_lea.vmem %s3, %s629
      $region44: #{conv2_forward.1} parent=39 // pred_fallthru
        _
    $region40: #{conv2_forward.1} parent=5 // pred_fallthru
      _
  $region6: #{conv2_forward.1} parent=0 // loop_footer
    %s13 = sadd.s32 1, %s9
  $region7: #{conv2_forward.1} parent=0 // loop_footer_branch
    %8 = sbr.rel target = $region3
  $region8: #{conv2_forward.1} parent=0 // loop_exit
    _

</llo_original>
